<compile_context>
chip_gen: v6e
topology: v6e:2x2x1
jax: 0.10.0
libtpu: 0.0.40
codegen_flags: <defaults>
</compile_context>

<pallas_src>
import functools
import math

import jax
import jax.numpy as jnp
from jax import lax
from jax.experimental import pallas as pl
from jax.experimental.pallas import tpu as pltpu


# ----------------------------------------------------------------------------
# Helpers
# ----------------------------------------------------------------------------
def _round_up(x, m):
    return ((x + m - 1) // m) * m


def _vmem_capacity_bytes():
    """Physical VMEM of the current chip; conservative 64 MiB (v7x) fallback."""
    try:
        info = pltpu.get_tpu_info()
        cap = getattr(info, "vmem_capacity_bytes", None)
        if cap:
            return int(cap)
    except Exception:
        pass
    return 64 * 1024 * 1024


def _pick_tile(dim, prefs):
    """Largest preferred tile that evenly divides `dim`; else the full dim
    (a full-extent block is always legal w.r.t. the (8,128) rule)."""
    for t in prefs:
        if dim >= t and dim % t == 0:
            return t
    return dim


# ----------------------------------------------------------------------------
# Tiled linear kernels (y = x @ W^T [+ b]); W stored pre-transposed (Cin, Cout)
# ----------------------------------------------------------------------------
def _linear_kernel(x_ref, w_ref, o_ref, acc_ref):
    @pl.when(pl.program_id(2) == 0)
    def _init():
        acc_ref[...] = jnp.zeros_like(acc_ref)

    acc_ref[...] += jnp.dot(x_ref[...], w_ref[...], preferred_element_type=jnp.float32)

    @pl.when(pl.program_id(2) == pl.num_programs(2) - 1)
    def _finalize():
        o_ref[...] = acc_ref[...].astype(o_ref.dtype)


def _linear_bias_kernel(x_ref, w_ref, b_ref, o_ref, acc_ref):
    @pl.when(pl.program_id(2) == 0)
    def _init():
        acc_ref[...] = jnp.zeros_like(acc_ref)

    acc_ref[...] += jnp.dot(x_ref[...], w_ref[...], preferred_element_type=jnp.float32)

    @pl.when(pl.program_id(2) == pl.num_programs(2) - 1)
    def _finalize():
        o_ref[...] = (acc_ref[...] + b_ref[...].astype(jnp.float32)).astype(o_ref.dtype)


def _linear(x2d, w_t, bias=None):
    """x2d: (M, Cin), w_t: (Cin, Cout), bias: (Cout,) or None -> (M, Cout)."""
    M, Cin = x2d.shape
    Cout = w_t.shape[1]

    # Pad rows to a multiple of 256 so tm never collapses to 8/16 rows of a
    # 256-row MXU when M = B*N is not 128-divisible (e.g. ViT N = 197).
    Mp = M if (M < 192 or M % 256 == 0) else _round_up(M, 256)
    if Mp != M:
        x2d = jnp.pad(x2d, ((0, Mp - M), (0, 0)))

    tm = _pick_tile(Mp, (512, 256, 128, 64, 32, 16, 8))
    tn = _pick_tile(Cout, (512, 256, 128))
    tk = _pick_tile(Cin, (512, 256, 128))  # prefer big tk: amortizes acc RMW (v5e)
    grid = (Mp // tm, Cout // tn, Cin // tk)

    x_spec = pl.BlockSpec((tm, tk), lambda i, j, k: (i, k))
    w_spec = pl.BlockSpec((tk, tn), lambda i, j, k: (k, j))
    o_spec = pl.BlockSpec((tm, tn), lambda i, j, k: (i, j))

    itemsize = jnp.dtype(x2d.dtype).itemsize
    cost = pl.CostEstimate(
        flops=int(2 * Mp * Cin * Cout),
        transcendentals=0,
        bytes_accessed=int((Mp * Cin + Cin * Cout + Mp * Cout) * itemsize),
    )
    cparams = pltpu.CompilerParams(
        dimension_semantics=("parallel", "parallel", "arbitrary")
    )
    scratch = [pltpu.VMEM((tm, tn), jnp.float32)]
    out_shape = jax.ShapeDtypeStruct((Mp, Cout), x2d.dtype)

    if bias is None:
        y = pl.pallas_call(
            _linear_kernel,
            grid=grid,
            in_specs=[x_spec, w_spec],
            out_specs=o_spec,
            out_shape=out_shape,
            scratch_shapes=scratch,
            compiler_params=cparams,
            cost_estimate=cost,
        )(x2d, w_t)
    else:
        b_spec = pl.BlockSpec((1, tn), lambda i, j, k: (0, j))
        y = pl.pallas_call(
            _linear_bias_kernel,
            grid=grid,
            in_specs=[x_spec, w_spec, b_spec],
            out_specs=o_spec,
            out_shape=out_shape,
            scratch_shapes=scratch,
            compiler_params=cparams,
            cost_estimate=cost,
        )(x2d, w_t, bias.reshape(1, Cout))

    return y[:M] if Mp != M else y


# ----------------------------------------------------------------------------
# Multi-head attention: grid = (B, N//tq, H), H innermost ("arbitrary").
# qkvt layout: (3, B, H, N, D).  attn written per step; ctx (1,tq,C) block is
# VMEM-resident across the head axis and flushed once per (b, q-tile).
# ----------------------------------------------------------------------------
def _attn_kernel(q_ref, k_ref, v_ref, attn_ref, out_ref, ctx_acc,
                 *, scale, head_dim, num_heads, mm_dtype):
    # q_ref: (1,1,1,tq,D)  k_ref/v_ref: (1,1,1,N,D)
    # attn_ref: (1,1,tq,N) out_ref: (1,tq,C)   ctx_acc: (H,tq,D) f32 scratch
    h = pl.program_id(2)

    qh = q_ref[0, 0, 0] * scale          # scale & 1/temperature folded into q
    kh = k_ref[0, 0, 0]
    vh = v_ref[0, 0, 0]
    if mm_dtype is not None:             # optional bf16 MXU fast path (v6e/v7x)
        qh = qh.astype(mm_dtype)
        kh = kh.astype(mm_dtype)
        vh = vh.astype(mm_dtype)

    # q @ k^T without materializing a transpose: contract the last dims.
    s = lax.dot_general(
        qh, kh,
        dimension_numbers=(((1,), (1,)), ((), ())),
        preferred_element_type=jnp.float32,
    )  # (tq, N) fp32

    # numerically-stable softmax over the key axis (f32)
    m = jnp.max(s, axis=-1, keepdims=True)
    p = jnp.exp(s - m)
    denom = jnp.sum(p, axis=-1, keepdims=True)
    inv = pl.reciprocal(denom, approx=True)   # EUP slot
    inv = inv * (2.0 - denom * inv)           # one Newton step -> fp32 accuracy
    attn = p * inv

    attn_ref[0, 0] = attn.astype(attn_ref.dtype)

    ctx = jnp.dot(attn.astype(vh.dtype), vh, preferred_element_type=jnp.float32)
    ctx_acc[h] = ctx                          # dynamic index on leading dim only

    # Last head: assemble the full lane-dense (tq, C) ctx block (static offsets)
    # and let the pipeline flush it to HBM once when the q-tile changes.
    @pl.when(h == num_heads - 1)
    def _write_ctx():
        for hh in range(num_heads):
            out_ref[0, :, hh * head_dim:(hh + 1) * head_dim] = (
                ctx_acc[hh].astype(out_ref.dtype)
            )


def _attn_vmem_bytes(tq, n, num_heads, head_dim, channels, itemsize):
    """Working-set estimate: all pipelined blocks (x2) + scratch + temporaries."""
    dp = _round_up(head_dim, 128)       # lane padding of the trailing D dim
    nl = _round_up(n, 128)
    cl = _round_up(channels, 128)
    tqs = _round_up(tq, 8)
    ns = _round_up(n, 8)
    q = 2 * tqs * dp * itemsize
    kv = 2 * 2 * ns * dp * itemsize
    attn = 2 * tqs * nl * itemsize
    ctx = 2 * tqs * cl * itemsize
    acc = num_heads * tqs * dp * 4
    tmp = 3 * tqs * nl * 4              # s / p / attn fp32 temporaries
    return q + kv + attn + ctx + acc + tmp


def _pick_q_tile(n, num_heads, head_dim, channels, itemsize, budget):
    cands = [n] + [t for t in (1024, 512, 256, 128, 64, 32, 16, 8)
                   if t < n and n % t == 0]
    for t in cands:
        if _attn_vmem_bytes(t, n, num_heads, head_dim, channels, itemsize) <= budget:
            return t
    return cands[-1]


def _multihead_attention(qkvt, scale, mm_dtype=None):
    """qkvt: (3, B, H, N, D) -> (attn (B,H,N,N), ctx (B,N,C))."""
    _, B, H, N, D = qkvt.shape
    C = H * D
    dtype = qkvt.dtype
    itemsize = jnp.dtype(dtype).itemsize

    cap = _vmem_capacity_bytes()
    budget = int(cap * 0.45)
    tq = _pick_q_tile(N, H, D, C, itemsize, budget)
    workset = _attn_vmem_bytes(tq, N, H, D, C, itemsize)
    vmem_limit = int(min(cap * 0.85, max(32 * 1024 * 1024, workset * 1.6)))

    grid = (B, N // tq, H)

    kernel = functools.partial(
        _attn_kernel, scale=scale, head_dim=D, num_heads=H, mm_dtype=mm_dtype
    )

    q_spec = pl.BlockSpec((1, 1, 1, tq, D), lambda b, qi, h: (0, b, h, qi, 0))
    k_spec = pl.BlockSpec((1, 1, 1, N, D), lambda b, qi, h: (1, b, h, 0, 0))
    v_spec = pl.BlockSpec((1, 1, 1, N, D), lambda b, qi, h: (2, b, h, 0, 0))
    attn_spec = pl.BlockSpec((1, 1, tq, N), lambda b, qi, h: (b, h, qi, 0))
    out_spec = pl.BlockSpec((1, tq, C), lambda b, qi, h: (b, qi, 0))  # const in h

    cost = pl.CostEstimate(
        flops=int(4 * B * H * N * N * D),
        transcendentals=int(B * H * N * N),
        bytes_accessed=int((3 * B * N * C + B * H * N * N + B * N * C) * itemsize),
    )

    attn, ctx = pl.pallas_call(
        kernel,
        grid=grid,
        in_specs=[q_spec, k_spec, v_spec],
        out_specs=[attn_spec, out_spec],
        out_shape=(
            jax.ShapeDtypeStruct((B, H, N, N), dtype),   # attn in input dtype
            jax.ShapeDtypeStruct((B, N, C), dtype),      # ctx already (B,N,C)
        ),
        scratch_shapes=[pltpu.VMEM((H, tq, D), jnp.float32)],
        compiler_params=pltpu.CompilerParams(
            dimension_semantics=("parallel", "parallel", "arbitrary"),
            vmem_limit_bytes=vmem_limit,
        ),
        cost_estimate=cost,
    )(qkvt, qkvt, qkvt)
    return attn, ctx


# ----------------------------------------------------------------------------
# Full forward pass
# ----------------------------------------------------------------------------
def attention_forward(x, params, num_heads, temperature=1.0, mm_dtype=None):
    """Reproduces Attention.forward. Returns (x_out (B,N,C), attn (B,H,N,N)).

    mm_dtype: optional matmul operand dtype (e.g. jnp.bfloat16) for the v6e/v7x
    MXU fast path; accumulation stays fp32. Default None = input dtype.
    """
    B, N, C = x.shape
    H = num_heads
    assert C % H == 0
    D = C // H
    scale = (D ** -0.5) / float(temperature)   # temperature folded into the scale

    # qkv projection (qkv_bias=False -> no-bias kernel).
    qkv = _linear(x.reshape(B * N, C), params["w_qkv_t"], params.get("b_qkv"))

    # Head-major layout for per-head (N, D) tiles. One XLA rearrangement.
    qkvt = jnp.transpose(qkv.reshape(B, N, 3, H, D), (2, 0, 3, 1, 4))  # (3,B,H,N,D)

    # q_norm / k_norm are nn.Identity (qk_norm=False); dropouts are identity (p=0).
    attn, ctx = _multihead_attention(qkvt, scale, mm_dtype=mm_dtype)

    x_out = _linear(ctx.reshape(B * N, C), params["w_proj_t"], params["b_proj"])
    return x_out.reshape(B, N, C), attn


# ----------------------------------------------------------------------------
# Pure-JAX reference (for correctness checking), parameter init, demo
# ----------------------------------------------------------------------------
def _reference(x, params, num_heads, temperature=1.0):
    B, N, C = x.shape
    H = num_heads
    D = C // H
    qkv = x.reshape(B * N, C) @ params["w_qkv_t"]
    qkv = qkv.reshape(B, N, 3, H, D).transpose(2, 0, 3, 1, 4)
    q, k, v = qkv[0], qkv[1], qkv[2]
    q = q * (D ** -0.5)
    attn = (q @ jnp.swapaxes(k, -1, -2)) / temperature
    attn = jax.nn.softmax(attn, axis=-1)
    xo = jnp.swapaxes(attn @ v, 1, 2).reshape(B, N, C)
    xo = xo @ params["w_proj_t"] + params["b_proj"]
    return xo, attn


def init_params(key, dim):
    k1, k2, k3 = jax.random.split(key, 3)
    bound = 1.0 / math.sqrt(dim)   # PyTorch nn.Linear default init
    # stored pre-transposed as (C_in, C_out) for x @ W^T
    w_qkv_t = jax.random.uniform(k1, (dim, 3 * dim), jnp.float32, -bound, bound)
    w_proj_t = jax.random.uniform(k2, (dim, dim), jnp.float32, -bound, bound)
    b_proj = jax.random.uniform(k3, (dim,), jnp.float32, -bound, bound)
    return {"w_qkv_t": w_qkv_t, "w_proj_t": w_proj_t, "b_proj": b_proj}


if __name__ == "__main__":
    B, N, C = 2, 8, 32
    num_heads = 4          # head_dim = 8
    temperature = 1.0

    key = jax.random.PRNGKey(0)
    kx, kp = jax.random.split(key)
    x = jax.random.normal(kx, (B, N, C), dtype=jnp.float32)
    params = init_params(kp, C)

    fwd = jax.jit(
        functools.partial(attention_forward, num_heads=num_heads,
                          temperature=temperature)
    )
    x_out, attn = fwd(x, params)
    jax.block_until_ready((x_out, attn))

    assert x_out.shape == (B, N, C)
    assert attn.shape == (B, num_heads, N, N)
    # softmax rows must sum to 1
    assert bool(jnp.allclose(jnp.sum(attn, axis=-1), 1.0, atol=1e-4))

    # check against a pure-JAX reference of the PyTorch forward
    x_ref, attn_ref = _reference(x, params, num_heads, temperature)
    assert bool(jnp.allclose(attn, attn_ref, rtol=1e-3, atol=1e-3))
    assert bool(jnp.allclose(x_out, x_ref, rtol=1e-3, atol=1e-3))

    print("KERNEL_OK")
</pallas_src>

<mosaic_0001>
module attributes {stable_mosaic.version = 11 : i64} {
  func.func @_attn_kernel(%arg0: i32, %arg1: i32, %arg2: i32, %arg3: memref<1x1x1x8x8xf32, #tpu.memory_space<vmem>>, %arg4: memref<1x1x1x8x8xf32, #tpu.memory_space<vmem>>, %arg5: memref<1x1x1x8x8xf32, #tpu.memory_space<vmem>>, %arg6: memref<1x1x8x8xf32, #tpu.memory_space<vmem>>, %arg7: memref<1x8x32xf32, #tpu.memory_space<vmem>>, %arg8: memref<4x8x8xf32, #tpu.memory_space<vmem>>) attributes {dimension_semantics = [#tpu.dimension_semantics<parallel>, #tpu.dimension_semantics<parallel>, #tpu.dimension_semantics<arbitrary>], iteration_bounds = array<i64: 2, 1, 4>, scalar_prefetch = 0 : i64, scratch_operands = 1 : i64, tpu.core_type = #tpu.core_type<tc>, window_params = [{transform_indices = @transform_0, window_bounds = array<i64: 1, 1, 1, 8, 8>}, {transform_indices = @transform_1, window_bounds = array<i64: 1, 1, 1, 8, 8>}, {transform_indices = @transform_2, window_bounds = array<i64: 1, 1, 1, 8, 8>}, {transform_indices = @transform_3, window_bounds = array<i64: 1, 1, 8, 8>}, {transform_indices = @transform_4, window_bounds = array<i64: 1, 8, 32>}]} {
    %c0 = arith.constant 0 : index
    %c0_0 = arith.constant 0 : index
    %c0_1 = arith.constant 0 : index
    %c0_2 = arith.constant 0 : index
    %c0_3 = arith.constant 0 : index
    %0 = vector.load %arg3[%c0, %c0_0, %c0_1, %c0_2, %c0_3] : memref<1x1x1x8x8xf32, #tpu.memory_space<vmem>>, vector<1x1x1x8x8xf32>
    %1 = vector.shape_cast %0 : vector<1x1x1x8x8xf32> to vector<8x8xf32>
    %cst = arith.constant 0.353553385 : f32
    %2 = vector.broadcast %cst : f32 to vector<8x8xf32>
    %3 = arith.mulf %1, %2 : vector<8x8xf32>
    %c0_4 = arith.constant 0 : index
    %c0_5 = arith.constant 0 : index
    %c0_6 = arith.constant 0 : index
    %c0_7 = arith.constant 0 : index
    %c0_8 = arith.constant 0 : index
    %4 = vector.load %arg4[%c0_4, %c0_5, %c0_6, %c0_7, %c0_8] : memref<1x1x1x8x8xf32, #tpu.memory_space<vmem>>, vector<1x1x1x8x8xf32>
    %5 = vector.shape_cast %4 : vector<1x1x1x8x8xf32> to vector<8x8xf32>
    %c0_9 = arith.constant 0 : index
    %c0_10 = arith.constant 0 : index
    %c0_11 = arith.constant 0 : index
    %c0_12 = arith.constant 0 : index
    %c0_13 = arith.constant 0 : index
    %6 = vector.load %arg5[%c0_9, %c0_10, %c0_11, %c0_12, %c0_13] : memref<1x1x1x8x8xf32, #tpu.memory_space<vmem>>, vector<1x1x1x8x8xf32>
    %7 = vector.shape_cast %6 : vector<1x1x1x8x8xf32> to vector<8x8xf32>
    %cst_14 = arith.constant dense<0.000000e+00> : vector<8x8xf32>
    %8 = tpu.matmul %3, %5, %cst_14 {dimension_numbers = #tpu.dot_dimension_numbers<[1], [1], [0], [0], [0, 0, 1, 0], [], []>} : vector<8x8xf32>, vector<8x8xf32>, vector<8x8xf32> -> vector<8x8xf32>
    %cst_15 = arith.constant dense<0xFF800000> : vector<8xf32>
    %9 = vector.multi_reduction <maximumf>, %8, %cst_15 [1] : vector<8x8xf32> to vector<8xf32>
    %10 = vector.shape_cast %9 : vector<8xf32> to vector<8x1xf32>
    %11 = vector.broadcast %10 : vector<8x1xf32> to vector<8x8xf32>
    %12 = arith.subf %8, %11 : vector<8x8xf32>
    %13 = math.exp %12 : vector<8x8xf32>
    %cst_16 = arith.constant dense<0.000000e+00> : vector<8xf32>
    %14 = vector.multi_reduction <add>, %13, %cst_16 [1] : vector<8x8xf32> to vector<8xf32>
    %15 = vector.shape_cast %14 : vector<8xf32> to vector<8x1xf32>
    %16 = tpu.reciprocal %15 {approx = true} : vector<8x1xf32> -> vector<8x1xf32>
    %17 = arith.mulf %15, %16 : vector<8x1xf32>
    %cst_17 = arith.constant 2.000000e+00 : f32
    %18 = vector.broadcast %cst_17 : f32 to vector<8x1xf32>
    %19 = arith.subf %18, %17 : vector<8x1xf32>
    %20 = arith.mulf %16, %19 : vector<8x1xf32>
    %21 = vector.broadcast %20 : vector<8x1xf32> to vector<8x8xf32>
    %22 = arith.mulf %13, %21 : vector<8x8xf32>
    %c0_18 = arith.constant 0 : index
    %c0_19 = arith.constant 0 : index
    %c0_20 = arith.constant 0 : index
    %c0_21 = arith.constant 0 : index
    %23 = vector.load %arg6[%c0_18, %c0_19, %c0_20, %c0_21] : memref<1x1x8x8xf32, #tpu.memory_space<vmem>>, vector<1x1x8x8xf32>
    %24 = vector.shape_cast %23 : vector<1x1x8x8xf32> to vector<8x8xf32>
    %25 = vector.shape_cast %22 : vector<8x8xf32> to vector<1x1x8x8xf32>
    tpu.vector_store %arg6[%c0_18, %c0_19, %c0_20, %c0_21], %25 {strides = array<i32>} : memref<1x1x8x8xf32, #tpu.memory_space<vmem>>, vector<1x1x8x8xf32>,
    %cst_22 = arith.constant dense<0.000000e+00> : vector<8x8xf32>
    %26 = tpu.matmul %22, %7, %cst_22 {dimension_numbers = #tpu.dot_dimension_numbers<[1], [0], [0], [1], [0, 0, 1, 1], [], []>} : vector<8x8xf32>, vector<8x8xf32>, vector<8x8xf32> -> vector<8x8xf32>
    %27 = arith.index_cast %arg2 : i32 to index
    %c0_23 = arith.constant 0 : index
    %c0_24 = arith.constant 0 : index
    %28 = vector.load %arg8[%27, %c0_23, %c0_24] : memref<4x8x8xf32, #tpu.memory_space<vmem>>, vector<1x8x8xf32>
    %29 = vector.shape_cast %28 : vector<1x8x8xf32> to vector<8x8xf32>
    %30 = vector.shape_cast %26 : vector<8x8xf32> to vector<1x8x8xf32>
    tpu.vector_store %arg8[%27, %c0_23, %c0_24], %30 {strides = array<i32>} : memref<4x8x8xf32, #tpu.memory_space<vmem>>, vector<1x8x8xf32>,
    %c3_i32 = arith.constant 3 : i32
    %31 = arith.cmpi eq, %arg2, %c3_i32 : i32
    %32 = arith.extui %31 : i1 to i32
    %c0_i32 = arith.constant 0 : i32
    %33 = arith.cmpi ne, %32, %c0_i32 : i32
    scf.if %33 {
      %c0_25 = arith.constant 0 : index
      %c0_26 = arith.constant 0 : index
      %c0_27 = arith.constant 0 : index
      %34 = vector.load %arg8[%c0_25, %c0_26, %c0_27] : memref<4x8x8xf32, #tpu.memory_space<vmem>>, vector<1x8x8xf32>
      %35 = vector.shape_cast %34 : vector<1x8x8xf32> to vector<8x8xf32>
      %c0_28 = arith.constant 0 : index
      %c0_29 = arith.constant 0 : index
      %c0_30 = arith.constant 0 : index
      %36 = vector.load %arg7[%c0_28, %c0_29, %c0_30] : memref<1x8x32xf32, #tpu.memory_space<vmem>>, vector<1x8x8xf32>
      %37 = vector.shape_cast %36 : vector<1x8x8xf32> to vector<8x8xf32>
      %38 = vector.shape_cast %35 : vector<8x8xf32> to vector<1x8x8xf32>
      tpu.vector_store %arg7[%c0_28, %c0_29, %c0_30], %38 {strides = array<i32>} : memref<1x8x32xf32, #tpu.memory_space<vmem>>, vector<1x8x8xf32>,
      %c1 = arith.constant 1 : index
      %c0_31 = arith.constant 0 : index
      %c0_32 = arith.constant 0 : index
      %39 = vector.load %arg8[%c1, %c0_31, %c0_32] : memref<4x8x8xf32, #tpu.memory_space<vmem>>, vector<1x8x8xf32>
      %40 = vector.shape_cast %39 : vector<1x8x8xf32> to vector<8x8xf32>
      %c0_33 = arith.constant 0 : index
      %c0_34 = arith.constant 0 : index
      %c8 = arith.constant 8 : index
      %41 = vector.load %arg7[%c0_33, %c0_34, %c8] : memref<1x8x32xf32, #tpu.memory_space<vmem>>, vector<1x8x8xf32>
      %42 = vector.shape_cast %41 : vector<1x8x8xf32> to vector<8x8xf32>
      %43 = vector.shape_cast %40 : vector<8x8xf32> to vector<1x8x8xf32>
      tpu.vector_store %arg7[%c0_33, %c0_34, %c8], %43 {strides = array<i32>} : memref<1x8x32xf32, #tpu.memory_space<vmem>>, vector<1x8x8xf32>,
      %c2 = arith.constant 2 : index
      %c0_35 = arith.constant 0 : index
      %c0_36 = arith.constant 0 : index
      %44 = vector.load %arg8[%c2, %c0_35, %c0_36] : memref<4x8x8xf32, #tpu.memory_space<vmem>>, vector<1x8x8xf32>
      %45 = vector.shape_cast %44 : vector<1x8x8xf32> to vector<8x8xf32>
      %c0_37 = arith.constant 0 : index
      %c0_38 = arith.constant 0 : index
      %c16 = arith.constant 16 : index
      %46 = vector.load %arg7[%c0_37, %c0_38, %c16] : memref<1x8x32xf32, #tpu.memory_space<vmem>>, vector<1x8x8xf32>
      %47 = vector.shape_cast %46 : vector<1x8x8xf32> to vector<8x8xf32>
      %48 = vector.shape_cast %45 : vector<8x8xf32> to vector<1x8x8xf32>
      tpu.vector_store %arg7[%c0_37, %c0_38, %c16], %48 {strides = array<i32>} : memref<1x8x32xf32, #tpu.memory_space<vmem>>, vector<1x8x8xf32>,
      %c3 = arith.constant 3 : index
      %c0_39 = arith.constant 0 : index
      %c0_40 = arith.constant 0 : index
      %49 = vector.load %arg8[%c3, %c0_39, %c0_40] : memref<4x8x8xf32, #tpu.memory_space<vmem>>, vector<1x8x8xf32>
      %50 = vector.shape_cast %49 : vector<1x8x8xf32> to vector<8x8xf32>
      %c0_41 = arith.constant 0 : index
      %c0_42 = arith.constant 0 : index
      %c24 = arith.constant 24 : index
      %51 = vector.load %arg7[%c0_41, %c0_42, %c24] : memref<1x8x32xf32, #tpu.memory_space<vmem>>, vector<1x8x8xf32>
      %52 = vector.shape_cast %51 : vector<1x8x8xf32> to vector<8x8xf32>
      %53 = vector.shape_cast %50 : vector<8x8xf32> to vector<1x8x8xf32>
      tpu.vector_store %arg7[%c0_41, %c0_42, %c24], %53 {strides = array<i32>} : memref<1x8x32xf32, #tpu.memory_space<vmem>>, vector<1x8x8xf32>,
    } else {
    }
    return
  }
  func.func @transform_0(%arg0: i32, %arg1: i32, %arg2: i32) -> (i32, i32, i32, i32, i32) {
    %c0_i32 = arith.constant 0 : i32
    %c0_i32_0 = arith.constant 0 : i32
    %c0_i32_1 = arith.constant 0 : i32
    return %c0_i32, %arg0, %arg2, %arg1, %c0_i32_0 : i32, i32, i32, i32, i32
  }
  func.func @transform_1(%arg0: i32, %arg1: i32, %arg2: i32) -> (i32, i32, i32, i32, i32) {
    %c1_i32 = arith.constant 1 : i32
    %c0_i32 = arith.constant 0 : i32
    %c0_i32_0 = arith.constant 0 : i32
    %c0_i32_1 = arith.constant 0 : i32
    return %c1_i32, %arg0, %arg2, %c0_i32, %c0_i32_0 : i32, i32, i32, i32, i32
  }
  func.func @transform_2(%arg0: i32, %arg1: i32, %arg2: i32) -> (i32, i32, i32, i32, i32) {
    %c2_i32 = arith.constant 2 : i32
    %c0_i32 = arith.constant 0 : i32
    %c0_i32_0 = arith.constant 0 : i32
    %c0_i32_1 = arith.constant 0 : i32
    return %c2_i32, %arg0, %arg2, %c0_i32, %c0_i32_0 : i32, i32, i32, i32, i32
  }
  func.func @transform_3(%arg0: i32, %arg1: i32, %arg2: i32) -> (i32, i32, i32, i32) {
    %c0_i32 = arith.constant 0 : i32
    %c0_i32_0 = arith.constant 0 : i32
    return %arg0, %arg2, %arg1, %c0_i32 : i32, i32, i32, i32
  }
  func.func @transform_4(%arg0: i32, %arg1: i32, %arg2: i32) -> (i32, i32, i32) {
    %c0_i32 = arith.constant 0 : i32
    %c0_i32_0 = arith.constant 0 : i32
    return %arg0, %arg1, %c0_i32 : i32, i32, i32
  }
}

module attributes {stable_mosaic.version = 11 : i64} {
  func.func @_linear_kernel(%arg0: i32, %arg1: i32, %arg2: i32, %arg3: memref<16x32xf32, #tpu.memory_space<vmem>>, %arg4: memref<32x96xf32, #tpu.memory_space<vmem>>, %arg5: memref<16x96xf32, #tpu.memory_space<vmem>>, %arg6: memref<16x96xf32, #tpu.memory_space<vmem>>) attributes {dimension_semantics = [#tpu.dimension_semantics<parallel>, #tpu.dimension_semantics<parallel>, #tpu.dimension_semantics<arbitrary>], iteration_bounds = array<i64: 1, 1, 1>, scalar_prefetch = 0 : i64, scratch_operands = 1 : i64, tpu.core_type = #tpu.core_type<tc>, window_params = [{transform_indices = @transform_0, window_bounds = array<i64: 16, 32>}, {transform_indices = @transform_1, window_bounds = array<i64: 32, 96>}, {transform_indices = @transform_2, window_bounds = array<i64: 16, 96>}]} {
    %c0_i32 = arith.constant 0 : i32
    %0 = arith.cmpi eq, %arg2, %c0_i32 : i32
    %1 = arith.extui %0 : i1 to i32
    %c0_i32_0 = arith.constant 0 : i32
    %2 = arith.cmpi ne, %1, %c0_i32_0 : i32
    scf.if %2 {
      %cst_10 = arith.constant 0.000000e+00 : f32
      %12 = vector.broadcast %cst_10 : f32 to vector<16x96xf32>
      %c0_11 = arith.constant 0 : index
      %c0_12 = arith.constant 0 : index
      %13 = vector.load %arg6[%c0_11, %c0_12] : memref<16x96xf32, #tpu.memory_space<vmem>>, vector<16x96xf32>
      tpu.vector_store %arg6[%c0_11, %c0_12], %12 {strides = array<i32>} : memref<16x96xf32, #tpu.memory_space<vmem>>, vector<16x96xf32>,
    } else {
    }
    %c0 = arith.constant 0 : index
    %c0_1 = arith.constant 0 : index
    %3 = vector.load %arg6[%c0, %c0_1] : memref<16x96xf32, #tpu.memory_space<vmem>>, vector<16x96xf32>
    %c0_2 = arith.constant 0 : index
    %c0_3 = arith.constant 0 : index
    %4 = vector.load %arg3[%c0_2, %c0_3] : memref<16x32xf32, #tpu.memory_space<vmem>>, vector<16x32xf32>
    %c0_4 = arith.constant 0 : index
    %c0_5 = arith.constant 0 : index
    %5 = vector.load %arg4[%c0_4, %c0_5] : memref<32x96xf32, #tpu.memory_space<vmem>>, vector<32x96xf32>
    %cst = arith.constant dense<0.000000e+00> : vector<16x96xf32>
    %6 = tpu.matmul %4, %5, %cst {dimension_numbers = #tpu.dot_dimension_numbers<[1], [0], [0], [1], [0, 0, 1, 1], [], []>} : vector<16x32xf32>, vector<32x96xf32>, vector<16x96xf32> -> vector<16x96xf32>
    %7 = arith.addf %3, %6 : vector<16x96xf32>
    %c0_6 = arith.constant 0 : index
    %c0_7 = arith.constant 0 : index
    %8 = vector.load %arg6[%c0_6, %c0_7] : memref<16x96xf32, #tpu.memory_space<vmem>>, vector<16x96xf32>
    tpu.vector_store %arg6[%c0_6, %c0_7], %7 {strides = array<i32>} : memref<16x96xf32, #tpu.memory_space<vmem>>, vector<16x96xf32>,
    %c0_i32_8 = arith.constant 0 : i32
    %9 = arith.cmpi eq, %arg2, %c0_i32_8 : i32
    %10 = arith.extui %9 : i1 to i32
    %c0_i32_9 = arith.constant 0 : i32
    %11 = arith.cmpi ne, %10, %c0_i32_9 : i32
    scf.if %11 {
      %c0_10 = arith.constant 0 : index
      %c0_11 = arith.constant 0 : index
      %12 = vector.load %arg6[%c0_10, %c0_11] : memref<16x96xf32, #tpu.memory_space<vmem>>, vector<16x96xf32>
      %c0_12 = arith.constant 0 : index
      %c0_13 = arith.constant 0 : index
      %13 = vector.load %arg5[%c0_12, %c0_13] : memref<16x96xf32, #tpu.memory_space<vmem>>, vector<16x96xf32>
      tpu.vector_store %arg5[%c0_12, %c0_13], %12 {strides = array<i32>} : memref<16x96xf32, #tpu.memory_space<vmem>>, vector<16x96xf32>,
    } else {
    }
    return
  }
  func.func @transform_0(%arg0: i32, %arg1: i32, %arg2: i32) -> (i32, i32) {
    %c0_i32 = arith.constant 0 : i32
    return %arg0, %arg2 : i32, i32
  }
  func.func @transform_1(%arg0: i32, %arg1: i32, %arg2: i32) -> (i32, i32) {
    %c0_i32 = arith.constant 0 : i32
    return %arg2, %arg1 : i32, i32
  }
  func.func @transform_2(%arg0: i32, %arg1: i32, %arg2: i32) -> (i32, i32) {
    %c0_i32 = arith.constant 0 : i32
    return %arg0, %arg1 : i32, i32
  }
}

module attributes {stable_mosaic.version = 11 : i64} {
  func.func @_linear_bias_kernel(%arg0: i32, %arg1: i32, %arg2: i32, %arg3: memref<16x32xf32, #tpu.memory_space<vmem>>, %arg4: memref<32x32xf32, #tpu.memory_space<vmem>>, %arg5: memref<1x32xf32, #tpu.memory_space<vmem>>, %arg6: memref<16x32xf32, #tpu.memory_space<vmem>>, %arg7: memref<16x32xf32, #tpu.memory_space<vmem>>) attributes {dimension_semantics = [#tpu.dimension_semantics<parallel>, #tpu.dimension_semantics<parallel>, #tpu.dimension_semantics<arbitrary>], iteration_bounds = array<i64: 1, 1, 1>, scalar_prefetch = 0 : i64, scratch_operands = 1 : i64, tpu.core_type = #tpu.core_type<tc>, window_params = [{transform_indices = @transform_0, window_bounds = array<i64: 16, 32>}, {transform_indices = @transform_1, window_bounds = array<i64: 32, 32>}, {transform_indices = @transform_2, window_bounds = array<i64: 1, 32>}, {transform_indices = @transform_3, window_bounds = array<i64: 16, 32>}]} {
    %c0_i32 = arith.constant 0 : i32
    %0 = arith.cmpi eq, %arg2, %c0_i32 : i32
    %1 = arith.extui %0 : i1 to i32
    %c0_i32_0 = arith.constant 0 : i32
    %2 = arith.cmpi ne, %1, %c0_i32_0 : i32
    scf.if %2 {
      %cst_10 = arith.constant 0.000000e+00 : f32
      %12 = vector.broadcast %cst_10 : f32 to vector<16x32xf32>
      %c0_11 = arith.constant 0 : index
      %c0_12 = arith.constant 0 : index
      %13 = vector.load %arg7[%c0_11, %c0_12] : memref<16x32xf32, #tpu.memory_space<vmem>>, vector<16x32xf32>
      tpu.vector_store %arg7[%c0_11, %c0_12], %12 {strides = array<i32>} : memref<16x32xf32, #tpu.memory_space<vmem>>, vector<16x32xf32>,
    } else {
    }
    %c0 = arith.constant 0 : index
    %c0_1 = arith.constant 0 : index
    %3 = vector.load %arg7[%c0, %c0_1] : memref<16x32xf32, #tpu.memory_space<vmem>>, vector<16x32xf32>
    %c0_2 = arith.constant 0 : index
    %c0_3 = arith.constant 0 : index
    %4 = vector.load %arg3[%c0_2, %c0_3] : memref<16x32xf32, #tpu.memory_space<vmem>>, vector<16x32xf32>
    %c0_4 = arith.constant 0 : index
    %c0_5 = arith.constant 0 : index
    %5 = vector.load %arg4[%c0_4, %c0_5] : memref<32x32xf32, #tpu.memory_space<vmem>>, vector<32x32xf32>
    %cst = arith.constant dense<0.000000e+00> : vector<16x32xf32>
    %6 = tpu.matmul %4, %5, %cst {dimension_numbers = #tpu.dot_dimension_numbers<[1], [0], [0], [1], [0, 0, 1, 1], [], []>} : vector<16x32xf32>, vector<32x32xf32>, vector<16x32xf32> -> vector<16x32xf32>
    %7 = arith.addf %3, %6 : vector<16x32xf32>
    %c0_6 = arith.constant 0 : index
    %c0_7 = arith.constant 0 : index
    %8 = vector.load %arg7[%c0_6, %c0_7] : memref<16x32xf32, #tpu.memory_space<vmem>>, vector<16x32xf32>
    tpu.vector_store %arg7[%c0_6, %c0_7], %7 {strides = array<i32>} : memref<16x32xf32, #tpu.memory_space<vmem>>, vector<16x32xf32>,
    %c0_i32_8 = arith.constant 0 : i32
    %9 = arith.cmpi eq, %arg2, %c0_i32_8 : i32
    %10 = arith.extui %9 : i1 to i32
    %c0_i32_9 = arith.constant 0 : i32
    %11 = arith.cmpi ne, %10, %c0_i32_9 : i32
    scf.if %11 {
      %c0_10 = arith.constant 0 : index
      %c0_11 = arith.constant 0 : index
      %12 = vector.load %arg7[%c0_10, %c0_11] : memref<16x32xf32, #tpu.memory_space<vmem>>, vector<16x32xf32>
      %c0_12 = arith.constant 0 : index
      %c0_13 = arith.constant 0 : index
      %13 = vector.load %arg5[%c0_12, %c0_13] : memref<1x32xf32, #tpu.memory_space<vmem>>, vector<1x32xf32>
      %14 = vector.broadcast %13 : vector<1x32xf32> to vector<16x32xf32>
      %15 = arith.addf %12, %14 : vector<16x32xf32>
      %c0_14 = arith.constant 0 : index
      %c0_15 = arith.constant 0 : index
      %16 = vector.load %arg6[%c0_14, %c0_15] : memref<16x32xf32, #tpu.memory_space<vmem>>, vector<16x32xf32>
      tpu.vector_store %arg6[%c0_14, %c0_15], %15 {strides = array<i32>} : memref<16x32xf32, #tpu.memory_space<vmem>>, vector<16x32xf32>,
    } else {
    }
    return
  }
  func.func @transform_0(%arg0: i32, %arg1: i32, %arg2: i32) -> (i32, i32) {
    %c0_i32 = arith.constant 0 : i32
    return %arg0, %arg2 : i32, i32
  }
  func.func @transform_1(%arg0: i32, %arg1: i32, %arg2: i32) -> (i32, i32) {
    %c0_i32 = arith.constant 0 : i32
    return %arg2, %arg1 : i32, i32
  }
  func.func @transform_2(%arg0: i32, %arg1: i32, %arg2: i32) -> (i32, i32) {
    %c0_i32 = arith.constant 0 : i32
    %c0_i32_0 = arith.constant 0 : i32
    return %c0_i32, %arg1 : i32, i32
  }
  func.func @transform_3(%arg0: i32, %arg1: i32, %arg2: i32) -> (i32, i32) {
    %c0_i32 = arith.constant 0 : i32
    return %arg0, %arg1 : i32, i32
  }
}

</mosaic_0001>

<llo_original>
// kernel: attention_forward.3
$region0: #{attention_forward.3}
  #allocation0 [shape = 'u32[]', space=smem, size = 0x4, offset = 0x4, fixed_abs, tag = 'smem constant byte address 0x4 - core index']
  #allocation1 [shape = 'u32[144,128]{1,0:T(1,128)}', space=vmem, size = 0x12000, scoped, tag = 'internal scratch']
  #allocation2 [shape = 'f32[16,96]{1,0:T(8,128)}', space=vmem, size = 0x2000, scoped, tag = 'scratch operand']
  %s0 = inlined_call_operand.hbm [shape: f32[16,32], index: 0, kind: input, shape index: {}]
  %s1 = inlined_call_operand.hbm [shape: f32[32,96], index: 1, kind: input, shape index: {}]
  %s2 = inlined_call_operand.vmem [shape: f32[16,96], index: 2, kind: output, shape index: {}]
  %s3 = sld [smem:[#allocation0]]
  $region34: #{attention_forward.3} parent=0
    _
  %s5 = ssub.s32 1, %s3
  %s6 = scalar_select 0, %s5, %s3
  $region1: #{attention_forward.3} parent=0
    #allocation3 [shape = 'u8[8192]{0}', space=vmem, size = 0x2000, scoped, tag = 'input window, operand 0, single buffered']
    #allocation4 [shape = 's32[1]{0}', space=sflag, size = 0x4, scoped, tag = 'scoped memory for attention_forward.3']
    #allocation5 [shape = 'u8[16384]{0}', space=vmem, size = 0x4000, scoped, tag = 'input window, operand 1, single buffered']
    #allocation6 [shape = 's32[1]{0}', space=sflag, size = 0x4, scoped, tag = 'scoped memory for attention_forward.3']
    %7 = vsyncpa [#allocation4], 0
    %8 = vsyncpa [#allocation6], 0
    // Predicated region
    $region2: #{attention_forward.3} parent=1 // pred_check
      _
    $region3: #{attention_forward.3} parent=1 // pred_check_branch
      %10 = sbr.rel (0) target = $region5
    $region4: #{attention_forward.3} parent=1 // pred_region
      %s12 = ssub.s32 256, 256
      %13 = vsyncadd [#allocation4], %s12
      %s14 = sshll.u32 [#allocation3], 4
      %s15 = int_to_ptr.vmem [resolvable:$true] %s14
      %20 = dma.hbm_to_vmem [thread:$0]  %s0, 256, %s15, [#allocation4], 128, 128, 8
    $region5: #{attention_forward.3} parent=1 // pred_fallthru
      _
    // Predicated region
    $region6: #{attention_forward.3} parent=1 // pred_check
      _
    $region7: #{attention_forward.3} parent=1 // pred_check_branch
      %22 = sbr.rel (0) target = $region9
    $region8: #{attention_forward.3} parent=1 // pred_region
      %s24 = ssub.s32 512, 512
      %25 = vsyncadd [#allocation6], %s24
      %s26 = sshll.u32 [#allocation5], 4
      %s27 = int_to_ptr.vmem [resolvable:$true] %s26
      %32 = dma.hbm_to_vmem [thread:$0]  %s1, 512, %s27, [#allocation6], 128, 128, 8
    $region9: #{attention_forward.3} parent=1 // pred_fallthru
      _
    // Predicated region
    $region10: #{attention_forward.3} parent=1 // pred_check
      _
    $region11: #{attention_forward.3} parent=1 // pred_check_branch
      %34 = sbr.rel (0) target = $region13
    $region12: #{attention_forward.3} parent=1 // pred_region
      %35 = dma.done [#allocation4], 256
    $region13: #{attention_forward.3} parent=1 // pred_fallthru
      _
    // Predicated region
    $region14: #{attention_forward.3} parent=1 // pred_check
      _
    $region15: #{attention_forward.3} parent=1 // pred_check_branch
      %37 = sbr.rel (0) target = $region17
    $region16: #{attention_forward.3} parent=1 // pred_region
      %38 = dma.done [#allocation6], 512
    $region17: #{attention_forward.3} parent=1 // pred_fallthru
      _
    %p39 = scmp.eq.s32.totalorder 0, 0
    // Predicated region
    $region18: #{attention_forward.3} parent=1 // pred_check
      %p40 = pneg %p39
    $region19: #{attention_forward.3} parent=1 // pred_check_branch
      %42 = sbr.rel (%p40) target = $region21
    $region20: #{attention_forward.3} parent=1 // pred_region
      %vm43 = vcmask 785408
      %44 = vst.msk [vmem:[#allocation2] sm:$0xff] %vm43, 0.0
      %45 = vst.msk [vmem:[#allocation2 + $0x8] sm:$0xff] %vm43, 0.0
    $region21: #{attention_forward.3} parent=1 // pred_fallthru
      _
    %v46 = vld [vmem:[#allocation2] sm:$0xff]
    %v47 = vld [vmem:[#allocation2 + $0x8] sm:$0xff]
    %v48 = vld [vmem:[#allocation3] sm:$0xff]
    %v49 = vld [vmem:[#allocation3 + $0x8] sm:$0xff]
    %v50 = vld [vmem:[#allocation5] sm:$0xff]
    %v51 = vld [vmem:[#allocation5 + $0x8] sm:$0xff]
    %v52 = vld [vmem:[#allocation5 + $0x10] sm:$0xff]
    %v53 = vld [vmem:[#allocation5 + $0x18] sm:$0xff]
    %vm54 = vcmask 261120
    %v56 = vsel %vm54, %v48, 0
    %v59 = vsel %vm54, %v49, 0
    %61 = vmatprep.subr.mxu0 0.0
    %62 = vmatpush1.msra.mxu0 0.0
    %63 = vmatprep.subr.mxu0 0.0
    %64 = vmatpush1.msra.mxu0 0.0
    %65 = vmatprep.subr.mxu0 0.0
    %66 = vmatpush1.msra.mxu0 0.0
    %67 = vmatprep.subr.mxu0 0.0
    %68 = vmatpush1.msra.mxu0 0.0
    %69 = vmatprep.subr.mxu0 0.0
    %70 = vmatpush1.msra.mxu0 0.0
    %71 = vmatprep.subr.mxu0 0.0
    %72 = vmatpush1.msra.mxu0 0.0
    %73 = vmatprep.subr.mxu0 0.0
    %74 = vmatpush1.msra.mxu0 0.0
    %75 = vmatprep.subr.mxu0 0.0
    %76 = vmatpush1.msra.mxu0 0.0
    %77 = vmatprep.subr.mxu0 0.0
    %78 = vmatpush1.msra.mxu0 0.0
    %79 = vmatprep.subr.mxu0 0.0
    %80 = vmatpush1.msra.mxu0 0.0
    %81 = vmatprep.subr.mxu0 0.0
    %82 = vmatpush1.msra.mxu0 0.0
    %83 = vmatprep.subr.mxu0 0.0
    %84 = vmatpush1.msra.mxu0 0.0
    %85 = vmatprep.subr.mxu0 0.0
    %86 = vmatpush1.msra.mxu0 %v53
    %87 = vmatprep.subr.mxu0 0.0
    %88 = vmatpush1.msra.mxu0 %v52
    %89 = vmatprep.subr.mxu0 0.0
    %90 = vmatpush1.msra.mxu0 %v51
    %91 = vmatprep.subr.mxu0 0.0
    %92 = vmatpush1.msra.mxu0 %v50
    %93 = vmatprep.subr.mxu0 0.0
    %94 = vmatpush2.msra.mxu0 0.0
    %95 = vmatprep.subr.mxu0 0.0
    %96 = vmatpush2.msra.mxu0 0.0
    %97 = vmatprep.subr.mxu0 0.0
    %98 = vmatpush2.msra.mxu0 0.0
    %99 = vmatprep.subr.mxu0 0.0
    %100 = vmatpush2.msra.mxu0 0.0
    %101 = vmatprep.subr.mxu0 0.0
    %102 = vmatpush2.msra.mxu0 0.0
    %103 = vmatprep.subr.mxu0 0.0
    %104 = vmatpush2.msra.mxu0 0.0
    %105 = vmatprep.subr.mxu0 0.0
    %106 = vmatpush2.msra.mxu0 0.0
    %107 = vmatprep.subr.mxu0 0.0
    %108 = vmatpush2.msra.mxu0 0.0
    %109 = vmatprep.subr.mxu0 0.0
    %110 = vmatpush2.msra.mxu0 0.0
    %111 = vmatprep.subr.mxu0 0.0
    %112 = vmatpush2.msra.mxu0 0.0
    %113 = vmatprep.subr.mxu0 0.0
    %114 = vmatpush2.msra.mxu0 0.0
    %115 = vmatprep.subr.mxu0 0.0
    %116 = vmatpush2.msra.mxu0 0.0
    %117 = vmatprep.subr.mxu0 0.0
    %118 = vmatpush2.msra.mxu0 0.0
    %119 = vmatprep.subr.mxu0 0.0
    %120 = vmatpush2.msra.mxu0 0.0
    %121 = vmatprep.subr.mxu0 0.0
    %122 = vmatpush2.msra.mxu0 0.0
    %123 = vmatprep.subr.mxu0 0.0
    %124 = vmatpush2.msra.mxu0 0.0
    %125 = vmatprep.mubr.f32.mxu0 0.0
    %126 = vmatmul.mubr.f32.gmra.mxu0 %v56
    %v127 = vpop.f32.mrf.mxu0
    %v128 = vadd.f32 0.0, %v127
    %v129 = vpop.f32.mrf.mxu0
    %130 = vmatprep.mubr.f32.mxu0 0.0
    %131 = vmatmul.mubr.f32.gmra.mxu0 %v59
    %v132 = vpop.f32.mrf.mxu0
    %v133 = vadd.f32 0.0, %v132
    %v134 = vpop.f32.mrf.mxu0
    %135 = vdwg.mxu0
    %v136 = vadd.f32 %v46, %v128
    %v137 = vadd.f32 %v47, %v133
    %vm138 = vcmask 785408
    %139 = vst.msk [vmem:[#allocation2] sm:$0xff] %vm138, %v136
    %140 = vst.msk [vmem:[#allocation2 + $0x8] sm:$0xff] %vm138, %v137
    // Predicated region
    $region22: #{attention_forward.3} parent=1 // pred_check
      %p141 = pneg %p39
    $region23: #{attention_forward.3} parent=1 // pred_check_branch
      %143 = sbr.rel (%p141) target = $region25
    $region24: #{attention_forward.3} parent=1 // pred_region
      %v144 = vld [vmem:[#allocation2] sm:$0xff]
      %v145 = vld [vmem:[#allocation2 + $0x8] sm:$0xff]
      %146 = vst.msk [vmem:[%s2] sm:$0xff] %vm138, %v144
      %147 = vst.msk [vmem:[%s2 + $0x8] sm:$0xff] %vm138, %v145
    $region25: #{attention_forward.3} parent=1 // pred_fallthru
      _
    // Predicated region
    $region26: #{attention_forward.3} parent=1 // pred_check
      _
    $region27: #{attention_forward.3} parent=1 // pred_check_branch
      %149 = sbr.rel (0) target = $region29
    $region28: #{attention_forward.3} parent=1 // pred_region
      _
    $region29: #{attention_forward.3} parent=1 // pred_fallthru
      _
    // Predicated region
    $region30: #{attention_forward.3} parent=1 // pred_check
      _
    $region31: #{attention_forward.3} parent=1 // pred_check_branch
      %151 = sbr.rel (0) target = $region33
    $region32: #{attention_forward.3} parent=1 // pred_region
      _
    $region33: #{attention_forward.3} parent=1 // pred_fallthru
      _
    %152 = vsyncpa [#allocation4], 1
    %153 = vsyncpa [#allocation6], 1

// kernel: attention_forward.4
$region0: #{attention_forward.4}
  #allocation0 [shape = 'u32[]', space=smem, size = 0x4, offset = 0x4, fixed_abs, tag = 'smem constant byte address 0x4 - core index']
  #allocation1 [shape = 'u32[144,128]{1,0:T(1,128)}', space=vmem, size = 0x12000, scoped, tag = 'internal scratch']
  #allocation2 [shape = 'f32[4,8,8]{2,1,0:T(8,128)}', space=vmem, size = 0x4000, scoped, tag = 'scratch operand']
  %s0 = inlined_call_operand.vmem [shape: f32[3,2,4,8,8], index: 0, kind: input, shape index: {}, may-alias: {0,1,2}]
  %s1 = inlined_call_operand.vmem [shape: f32[3,2,4,8,8], index: 1, kind: input, shape index: {}, may-alias: {0,1,2}]
  %s2 = inlined_call_operand.vmem [shape: f32[3,2,4,8,8], index: 2, kind: input, shape index: {}, may-alias: {0,1,2}]
  %s3 = inlined_call_operand.hbm [shape: f32[2,4,8,8], index: 3, kind: output, shape index: {0}]
  %s4 = inlined_call_operand.vmem [shape: f32[2,8,32], index: 4, kind: output, shape index: {1}]
  %5 = xla_tuple %s3, %s4
  %s6 = sld [smem:[#allocation0]]
  $region57: #{attention_forward.4} parent=0
    _
  %s8 = ssub.s32 1, %s6
  %s9 = scalar_select 0, %s8, %s6
  $region1: #{attention_forward.4} parent=0
    #allocation3 [shape = 'u8[8192]{0}', space=vmem, size = 0x2000, scoped, tag = 'output window, operand 0']
    #allocation4 [shape = 's32[2]{0}', space=sflag, size = 0x8, scoped, tag = 'scoped memory for attention_forward.4']
    %10 = vsyncpa [#allocation4], 0
    %s11 = scalar_lea.sflag [#allocation4], 1
    %12 = vsyncpa %s11, 0
    loop: start=0, step=1, limit=10
    $region2: #{attention_forward.4} parent=1 // loop_pre_header
      _
    $region3: #{attention_forward.4} parent=1 // loop_header
      %s14 = sphi 0, %s18
      %p15 = scmp.ge.s32.totalorder %s14, 10
      %s21 = sphi 0, %s40
      %s22 = sphi 0, %s36
      %s23 = sphi 0, %s32
      %s24 = sphi 0, %s21
      %s25 = sphi 0, %s22
      %s26 = sphi 0, %s23
      %s27 = sphi 0, %s24
      %s28 = sphi 0, %s25
      %s29 = sphi 0, %s26
      %s47 = sphi 0, %s49
      %s50 = sphi 0, %s47
      %s51 = sphi 0, %s50
      %s67 = sphi 0, %s51
      %s75 = sphi 0, %s77
      %s78 = sphi 0, %s75
      %s79 = sphi 0, %s78
      %s95 = sphi 0, %s79
      %s103 = sphi 0, %s105
      %s106 = sphi 0, %s103
      %s107 = sphi 0, %s106
      %s123 = sphi 0, %s107
      %s133 = sphi 0, %s135
      %s136 = sphi 0, %s133
      %s137 = sphi 0, %s136
      %s153 = sphi 0, %s137
      %s161 = sphi 0, %s163
      %s164 = sphi 0, %s161
      %s165 = sphi 0, %s164
      %s181 = sphi 0, %s165
    $region4: #{attention_forward.4} parent=1 // loop_header_branch
      %17 = sbr.rel (%p15) target = $region8
    $region5: #{attention_forward.4} parent=1 // loop_body
      %s19 = ssub.s32 %s14, 1
      %s20 = ssub.s32 %s14, 2
      %s30 = sadd.s32 1, %s23
      %p31 = scmp.ge.s32.totalorder %s30, 4
      %s32 = scalar_select %p31, 0, %s30
      %s33 = sadd.s32 1, %s22
      %s34 = scalar_select %p31, %s33, %s22
      %p35 = scmp.ge.s32.totalorder %s34, 1
      %s36 = scalar_select %p35, 0, %s34
      %s37 = sadd.s32 1, %s21
      %s38 = scalar_select %p35, %s37, %s21
      %p39 = scmp.ge.s32.totalorder %s38, 2
      %s40 = scalar_select %p39, 0, %s38
      %s41 = ssub.s32 %s21, %s40
      %s42 = ssub.s32 %s23, %s32
      %s43 = sor.u32 %s41, %s42
      %s44 = ssub.s32 %s22, %s36
      %s45 = sor.u32 %s43, %s44
      %p46 = scmp.eq.s32.totalorder %s45, 0
      %s48 = sadd.s32 %s47, 1
      %s49 = scalar_select %p46, %s47, %s48
      %p52 = pneg %p46
      %p53 = scmp.eq.s32.totalorder %s14, 7
      %p54 = por %p52, %p53
      %p55 = scmp.ne.s32.totalorder %s47, %s50
      %p56 = scmp.eq.s32.totalorder %s14, 0
      %p57 = por %p55, %p56
      %p58 = scmp.ne.s32.totalorder %s47, %s50
      %p59 = scmp.eq.s32.totalorder %s19, 7
      %p60 = por %p58, %p59
      %p61 = scmp.ne.s32.totalorder %s50, %s51
      %p62 = scmp.eq.s32.totalorder %s19, 0
      %p63 = por %p61, %p62
      %p64 = scmp.ne.s32.totalorder %s50, %s51
      %p65 = scmp.eq.s32.totalorder %s20, 7
      %p66 = por %p64, %p65
      %p68 = scmp.ne.s32.totalorder %s51, %s67
      %p69 = scmp.eq.s32.totalorder %s20, 0
      %p70 = por %p68, %p69
      %s71 = ssub.s32 %s21, %s40
      %s72 = ssub.s32 %s23, %s32
      %s73 = sor.u32 %s71, %s72
      %p74 = scmp.eq.s32.totalorder %s73, 0
      %s76 = sadd.s32 %s75, 1
      %s77 = scalar_select %p74, %s75, %s76
      %p80 = pneg %p74
      %p81 = scmp.eq.s32.totalorder %s14, 7
      %p82 = por %p80, %p81
      %p83 = scmp.ne.s32.totalorder %s75, %s78
      %p84 = scmp.eq.s32.totalorder %s14, 0
      %p85 = por %p83, %p84
      %p86 = scmp.ne.s32.totalorder %s75, %s78
      %p87 = scmp.eq.s32.totalorder %s19, 7
      %p88 = por %p86, %p87
      %p89 = scmp.ne.s32.totalorder %s78, %s79
      %p90 = scmp.eq.s32.totalorder %s19, 0
      %p91 = por %p89, %p90
      %p92 = scmp.ne.s32.totalorder %s78, %s79
      %p93 = scmp.eq.s32.totalorder %s20, 7
      %p94 = por %p92, %p93
      %p96 = scmp.ne.s32.totalorder %s79, %s95
      %p97 = scmp.eq.s32.totalorder %s20, 0
      %p98 = por %p96, %p97
      %s99 = ssub.s32 %s21, %s40
      %s100 = ssub.s32 %s23, %s32
      %s101 = sor.u32 %s99, %s100
      %p102 = scmp.eq.s32.totalorder %s101, 0
      %s104 = sadd.s32 %s103, 1
      %s105 = scalar_select %p102, %s103, %s104
      %p108 = pneg %p102
      %p109 = scmp.eq.s32.totalorder %s14, 7
      %p110 = por %p108, %p109
      %p111 = scmp.ne.s32.totalorder %s103, %s106
      %p112 = scmp.eq.s32.totalorder %s14, 0
      %p113 = por %p111, %p112
      %p114 = scmp.ne.s32.totalorder %s103, %s106
      %p115 = scmp.eq.s32.totalorder %s19, 7
      %p116 = por %p114, %p115
      %p117 = scmp.ne.s32.totalorder %s106, %s107
      %p118 = scmp.eq.s32.totalorder %s19, 0
      %p119 = por %p117, %p118
      %p120 = scmp.ne.s32.totalorder %s106, %s107
      %p121 = scmp.eq.s32.totalorder %s20, 7
      %p122 = por %p120, %p121
      %p124 = scmp.ne.s32.totalorder %s107, %s123
      %p125 = scmp.eq.s32.totalorder %s20, 0
      %p126 = por %p124, %p125
      %s127 = ssub.s32 %s21, %s40
      %s128 = ssub.s32 %s23, %s32
      %s129 = sor.u32 %s127, %s128
      %s130 = ssub.s32 %s22, %s36
      %s131 = sor.u32 %s129, %s130
      %p132 = scmp.eq.s32.totalorder %s131, 0
      %s134 = sadd.s32 %s133, 1
      %s135 = scalar_select %p132, %s133, %s134
      %p138 = pneg %p132
      %p139 = scmp.eq.s32.totalorder %s14, 7
      %p140 = por %p138, %p139
      %p141 = scmp.ne.s32.totalorder %s133, %s136
      %p142 = scmp.eq.s32.totalorder %s14, 0
      %p143 = por %p141, %p142
      %p144 = scmp.ne.s32.totalorder %s133, %s136
      %p145 = scmp.eq.s32.totalorder %s19, 7
      %p146 = por %p144, %p145
      %p147 = scmp.ne.s32.totalorder %s136, %s137
      %p148 = scmp.eq.s32.totalorder %s19, 0
      %p149 = por %p147, %p148
      %p150 = scmp.ne.s32.totalorder %s136, %s137
      %p151 = scmp.eq.s32.totalorder %s20, 7
      %p152 = por %p150, %p151
      %p154 = scmp.ne.s32.totalorder %s137, %s153
      %p155 = scmp.eq.s32.totalorder %s20, 0
      %p156 = por %p154, %p155
      %s157 = ssub.s32 %s21, %s40
      %s158 = ssub.s32 %s22, %s36
      %s159 = sor.u32 %s157, %s158
      %p160 = scmp.eq.s32.totalorder %s159, 0
      %s162 = sadd.s32 %s161, 1
      %s163 = scalar_select %p160, %s161, %s162
      %p166 = pneg %p160
      %p167 = scmp.eq.s32.totalorder %s14, 7
      %p168 = por %p166, %p167
      %p169 = scmp.ne.s32.totalorder %s161, %s164
      %p170 = scmp.eq.s32.totalorder %s14, 0
      %p171 = por %p169, %p170
      %p172 = scmp.ne.s32.totalorder %s161, %s164
      %p173 = scmp.eq.s32.totalorder %s19, 7
      %p174 = por %p172, %p173
      %p175 = scmp.ne.s32.totalorder %s164, %s165
      %p176 = scmp.eq.s32.totalorder %s19, 0
      %p177 = por %p175, %p176
      %p178 = scmp.ne.s32.totalorder %s164, %s165
      %p179 = scmp.eq.s32.totalorder %s20, 7
      %p180 = por %p178, %p179
      %p182 = scmp.ne.s32.totalorder %s165, %s181
      %p183 = scmp.eq.s32.totalorder %s20, 0
      %p184 = por %p182, %p183
      %p185 = scmp.le.s32.totalorder 1, %s14
      %p186 = scmp.lt.s32.totalorder %s14, 9
      %p187 = pnand %p185, %p186
      %p188 = pneg %p187
      // Predicated region
      $region9: #{attention_forward.4} parent=5 // pred_check
        _
      $region10: #{attention_forward.4} parent=5 // pred_check_branch
        %190 = sbr.rel (%p187) target = $region12
      $region11: #{attention_forward.4} parent=5 // pred_region
        %s191 = ssub.s32 %s14, 1
      $region12: #{attention_forward.4} parent=5 // pred_fallthru
        _
      %p192 = scmp.lt.s32.totalorder %s14, 8
      // Predicated region
      $region13: #{attention_forward.4} parent=5 // pred_check
        %p193 = pneg %p192
      $region14: #{attention_forward.4} parent=5 // pred_check_branch
        %195 = sbr.rel (%p193) target = $region16
      $region15: #{attention_forward.4} parent=5 // pred_region
        // Predicated region
        $region17: #{attention_forward.4} parent=15 // pred_check
          %p196 = pneg %p57
        $region18: #{attention_forward.4} parent=15 // pred_check_branch
          %198 = sbr.rel (%p196) target = $region20
        $region19: #{attention_forward.4} parent=15 // pred_region
          %p199 = scmp.lt.s32.totalorder %s21, 1
          %s200 = scalar_select %p199, %s21, 1
          %p201 = scmp.lt.s32.totalorder %s23, 3
          %s202 = scalar_select %p201, %s23, 3
          %p203 = scmp.lt.s32.totalorder %s22, 0
          %s204 = scalar_select %p203, %s22, 0
          %s205 = sadd.s32 %s204, %s202
          %s206 = smul.addr %s200, 4
          %s207 = sadd.s32 %s205, %s206
          %s208 = smul.addr %s207, 8
          %s209 = scalar_lea.vmem %s0, %s208
        $region20: #{attention_forward.4} parent=15 // pred_fallthru
          _
        // Predicated region
        $region21: #{attention_forward.4} parent=15 // pred_check
          %p210 = pneg %p85
        $region22: #{attention_forward.4} parent=15 // pred_check_branch
          %212 = sbr.rel (%p210) target = $region24
        $region23: #{attention_forward.4} parent=15 // pred_region
          %p213 = scmp.lt.s32.totalorder %s21, 1
          %s214 = scalar_select %p213, %s21, 1
          %p215 = scmp.lt.s32.totalorder %s23, 3
          %s216 = scalar_select %p215, %s23, 3
          %s217 = smul.addr %s214, 4
          %s218 = sadd.s32 %s216, %s217
          %s219 = sadd.s32 %s218, 8
          %s220 = smul.addr %s219, 8
          %s221 = scalar_lea.vmem %s1, %s220
        $region24: #{attention_forward.4} parent=15 // pred_fallthru
          _
        // Predicated region
        $region25: #{attention_forward.4} parent=15 // pred_check
          %p222 = pneg %p113
        $region26: #{attention_forward.4} parent=15 // pred_check_branch
          %224 = sbr.rel (%p222) target = $region28
        $region27: #{attention_forward.4} parent=15 // pred_region
          %p225 = scmp.lt.s32.totalorder %s21, 1
          %s226 = scalar_select %p225, %s21, 1
          %p227 = scmp.lt.s32.totalorder %s23, 3
          %s228 = scalar_select %p227, %s23, 3
          %s229 = smul.addr %s226, 4
          %s230 = sadd.s32 %s228, %s229
          %s231 = sadd.s32 %s230, 16
          %s232 = smul.addr %s231, 8
          %s233 = scalar_lea.vmem %s2, %s232
        $region28: #{attention_forward.4} parent=15 // pred_fallthru
          _
      $region16: #{attention_forward.4} parent=5 // pred_fallthru
        _
      %p234 = scmp.le.s32.totalorder 1, %s14
      %p235 = scmp.lt.s32.totalorder %s14, 9
      %p236 = pnand %p234, %p235
      %p237 = pneg %p236
      // Predicated region
      $region29: #{attention_forward.4} parent=5 // pred_check
        _
      $region30: #{attention_forward.4} parent=5 // pred_check_branch
        %239 = sbr.rel (%p236) target = $region32
      $region31: #{attention_forward.4} parent=5 // pred_region
        %s240 = ssub.s32 %s14, 1
        %p241 = scmp.lt.s32.totalorder %s24, 1
        %s242 = scalar_select %p241, %s24, 1
        %p243 = scmp.lt.s32.totalorder %s26, 3
        %s244 = scalar_select %p243, %s26, 3
        %p245 = scmp.lt.s32.totalorder %s25, 0
        %s246 = scalar_select %p245, %s25, 0
        %s247 = sadd.s32 %s246, %s244
        %s248 = smul.addr %s242, 4
        %s249 = sadd.s32 %s247, %s248
        %s250 = smul.addr %s249, 8
        %s251 = scalar_lea.vmem %s0, %s250
        %p252 = pneg %p63
        %p253 = pneg %p60
        %p254 = scmp.lt.s32.totalorder %s24, 1
        %s255 = scalar_select %p254, %s24, 1
        %p256 = scmp.lt.s32.totalorder %s26, 3
        %s257 = scalar_select %p256, %s26, 3
        %s258 = smul.addr %s255, 4
        %s259 = sadd.s32 %s257, %s258
        %s260 = sadd.s32 %s259, 8
        %s261 = smul.addr %s260, 8
        %s262 = scalar_lea.vmem %s1, %s261
        %p263 = pneg %p91
        %p264 = pneg %p88
        %p265 = scmp.lt.s32.totalorder %s24, 1
        %s266 = scalar_select %p265, %s24, 1
        %p267 = scmp.lt.s32.totalorder %s26, 3
        %s268 = scalar_select %p267, %s26, 3
        %s269 = smul.addr %s266, 4
        %s270 = sadd.s32 %s268, %s269
        %s271 = sadd.s32 %s270, 16
        %s272 = smul.addr %s271, 8
        %s273 = scalar_lea.vmem %s2, %s272
        %p274 = pneg %p119
        %p275 = pneg %p116
        %p276 = pneg %p149
        %p277 = pneg %p146
        %s278 = sand.u32 %s136, 1
        %s279 = scalar_lea.sflag [#allocation4], %s278
        %s280 = sand.u32 %s136, 1
        %s281 = smul.addr %s280, 8
        %s282 = scalar_lea.vmem [#allocation3], %s281
        %p283 = pneg %p177
        %p284 = pneg %p174
        %p285 = scmp.lt.s32.totalorder %s24, 1
        %s286 = scalar_select %p285, %s24, 1
        %p287 = scmp.lt.s32.totalorder %s25, 0
        %s288 = scalar_select %p287, %s25, 0
        %s289 = sadd.s32 %s288, %s286
        %s290 = smul.addr %s289, 8
        %s291 = scalar_lea.vmem %s4, %s290
        %p292 = scmp.lt.s32.totalorder %s24, 1
        %s293 = scalar_select %p292, %s24, 1
        %p294 = scmp.lt.s32.totalorder %s26, 3
        %s295 = scalar_select %p294, %s26, 3
        %p296 = scmp.lt.s32.totalorder %s25, 0
        %s297 = scalar_select %p296, %s25, 0
        %s298 = sadd.s32 %s297, %s295
        %s299 = smul.addr %s293, 4
        %s300 = sadd.s32 %s298, %s299
        %s301 = smul.addr %s300, 8
        %s302 = scalar_lea.vmem %s0, %s301
        %p303 = scmp.lt.s32.totalorder %s24, 1
        %s304 = scalar_select %p303, %s24, 1
        %p305 = scmp.lt.s32.totalorder %s26, 3
        %s306 = scalar_select %p305, %s26, 3
        %s307 = smul.addr %s304, 4
        %s308 = sadd.s32 %s306, %s307
        %s309 = sadd.s32 %s308, 8
        %s310 = smul.addr %s309, 8
        %s311 = scalar_lea.vmem %s1, %s310
        %p312 = scmp.lt.s32.totalorder %s24, 1
        %s313 = scalar_select %p312, %s24, 1
        %p314 = scmp.lt.s32.totalorder %s26, 3
        %s315 = scalar_select %p314, %s26, 3
        %s316 = smul.addr %s313, 4
        %s317 = sadd.s32 %s315, %s316
        %s318 = sadd.s32 %s317, 16
        %s319 = smul.addr %s318, 8
        %s320 = scalar_lea.vmem %s2, %s319
        %p321 = scmp.lt.s32.totalorder %s24, 1
        %s322 = scalar_select %p321, %s24, 1
        %p323 = scmp.lt.s32.totalorder %s25, 0
        %s324 = scalar_select %p323, %s25, 0
        %s325 = sadd.s32 %s324, %s322
        %s326 = smul.addr %s325, 8
        %s327 = scalar_lea.vmem %s4, %s326
        %v328 = vld [vmem:[%s302] sm:$0xff]
        %v329 = vmul.f32 %v328, 0.35355338
        %v330 = vld [vmem:[%s311] sm:$0xff]
        %v331 = vld [vmem:[%s320] sm:$0xff]
        %vm332 = vcmask 64512
        %v334 = vsel %vm332, %v329, 0
        %v337 = vsel %vm332, %v330, 0
        %339 = vmatprep.subr.mxu0 0.0
        %340 = vmatpush1.xpose.msra.mxu0 0.0
        %341 = vmatprep.subr.mxu0 0.0
        %342 = vmatpush1.xpose.msra.mxu0 0.0
        %343 = vmatprep.subr.mxu0 0.0
        %344 = vmatpush1.xpose.msra.mxu0 0.0
        %345 = vmatprep.subr.mxu0 0.0
        %346 = vmatpush1.xpose.msra.mxu0 0.0
        %347 = vmatprep.subr.mxu0 0.0
        %348 = vmatpush1.xpose.msra.mxu0 0.0
        %349 = vmatprep.subr.mxu0 0.0
        %350 = vmatpush1.xpose.msra.mxu0 0.0
        %351 = vmatprep.subr.mxu0 0.0
        %352 = vmatpush1.xpose.msra.mxu0 0.0
        %353 = vmatprep.subr.mxu0 0.0
        %354 = vmatpush1.xpose.msra.mxu0 0.0
        %355 = vmatprep.subr.mxu0 0.0
        %356 = vmatpush1.xpose.msra.mxu0 0.0
        %357 = vmatprep.subr.mxu0 0.0
        %358 = vmatpush1.xpose.msra.mxu0 0.0
        %359 = vmatprep.subr.mxu0 0.0
        %360 = vmatpush1.xpose.msra.mxu0 0.0
        %361 = vmatprep.subr.mxu0 0.0
        %362 = vmatpush1.xpose.msra.mxu0 0.0
        %363 = vmatprep.subr.mxu0 0.0
        %364 = vmatpush1.xpose.msra.mxu0 0.0
        %365 = vmatprep.subr.mxu0 0.0
        %366 = vmatpush1.xpose.msra.mxu0 0.0
        %367 = vmatprep.subr.mxu0 0.0
        %368 = vmatpush1.xpose.msra.mxu0 0.0
        %369 = vmatprep.subr.mxu0 0.0
        %370 = vmatpush1.xpose.msra.mxu0 %v337
        %371 = vmatprep.subr.mxu0 0.0
        %372 = vmatpush2.xpose.msra.mxu0 0.0
        %373 = vmatprep.subr.mxu0 0.0
        %374 = vmatpush2.xpose.msra.mxu0 0.0
        %375 = vmatprep.subr.mxu0 0.0
        %376 = vmatpush2.xpose.msra.mxu0 0.0
        %377 = vmatprep.subr.mxu0 0.0
        %378 = vmatpush2.xpose.msra.mxu0 0.0
        %379 = vmatprep.subr.mxu0 0.0
        %380 = vmatpush2.xpose.msra.mxu0 0.0
        %381 = vmatprep.subr.mxu0 0.0
        %382 = vmatpush2.xpose.msra.mxu0 0.0
        %383 = vmatprep.subr.mxu0 0.0
        %384 = vmatpush2.xpose.msra.mxu0 0.0
        %385 = vmatprep.subr.mxu0 0.0
        %386 = vmatpush2.xpose.msra.mxu0 0.0
        %387 = vmatprep.subr.mxu0 0.0
        %388 = vmatpush2.xpose.msra.mxu0 0.0
        %389 = vmatprep.subr.mxu0 0.0
        %390 = vmatpush2.xpose.msra.mxu0 0.0
        %391 = vmatprep.subr.mxu0 0.0
        %392 = vmatpush2.xpose.msra.mxu0 0.0
        %393 = vmatprep.subr.mxu0 0.0
        %394 = vmatpush2.xpose.msra.mxu0 0.0
        %395 = vmatprep.subr.mxu0 0.0
        %396 = vmatpush2.xpose.msra.mxu0 0.0
        %397 = vmatprep.subr.mxu0 0.0
        %398 = vmatpush2.xpose.msra.mxu0 0.0
        %399 = vmatprep.subr.mxu0 0.0
        %400 = vmatpush2.xpose.msra.mxu0 0.0
        %401 = vmatprep.subr.mxu0 0.0
        %402 = vmatpush2.xpose.msra.mxu0 0.0
        %403 = vmatprep.mubr.f32.mxu0 0.0
        %404 = vmatmul.mubr.f32.gmra.mxu0 %v334
        %v405 = vpop.f32.mrf.mxu0
        %v406 = vadd.f32 0.0, %v405
        %v407 = vpop.f32.mrf.mxu0
        %408 = vdwg.mxu0
        %v409 = vsel %vm332, %v406, -inf
        %410 = vmax.xlane.f32.xlu0 %v409
        %v411 = vpop.xlane.xlu0 %410
        %v412 = vsub.f32 %v406, %v411
        %v413 = vmul.f32 %v412, 1.442695
        %v414 = vpow.pop %v413
        %v415 = vsel %vm332, %v414, 0.0
        %416 = vadd.xlane.f32.xlu0 %v415
        %v417 = vpop.xlane.xlu0 %416
        %v418 = vrcp.pop %v417
        %v419 = vmul.f32 %v417, %v418
        %v420 = vsub.f32 2.0, %v419
        %v421 = vmul.f32 %v418, %v420
        %v422 = vmul.f32 %v414, %v421
        %423 = vst.msk [vmem:[%s282] sm:$0xff] %vm332, %v422
        %v425 = vsel %vm332, %v422, 0
        %427 = vmatprep.subr.mxu0 0.0
        %428 = vmatpush1.msra.mxu0 0.0
        %429 = vmatprep.subr.mxu0 0.0
        %430 = vmatpush1.msra.mxu0 0.0
        %431 = vmatprep.subr.mxu0 0.0
        %432 = vmatpush1.msra.mxu0 0.0
        %433 = vmatprep.subr.mxu0 0.0
        %434 = vmatpush1.msra.mxu0 0.0
        %435 = vmatprep.subr.mxu0 0.0
        %436 = vmatpush1.msra.mxu0 0.0
        %437 = vmatprep.subr.mxu0 0.0
        %438 = vmatpush1.msra.mxu0 0.0
        %439 = vmatprep.subr.mxu0 0.0
        %440 = vmatpush1.msra.mxu0 0.0
        %441 = vmatprep.subr.mxu0 0.0
        %442 = vmatpush1.msra.mxu0 0.0
        %443 = vmatprep.subr.mxu0 0.0
        %444 = vmatpush1.msra.mxu0 0.0
        %445 = vmatprep.subr.mxu0 0.0
        %446 = vmatpush1.msra.mxu0 0.0
        %447 = vmatprep.subr.mxu0 0.0
        %448 = vmatpush1.msra.mxu0 0.0
        %449 = vmatprep.subr.mxu0 0.0
        %450 = vmatpush1.msra.mxu0 0.0
        %451 = vmatprep.subr.mxu0 0.0
        %452 = vmatpush1.msra.mxu0 0.0
        %453 = vmatprep.subr.mxu0 0.0
        %454 = vmatpush1.msra.mxu0 0.0
        %455 = vmatprep.subr.mxu0 0.0
        %456 = vmatpush1.msra.mxu0 0.0
        %457 = vmatprep.subr.mxu0 0.0
        %458 = vmatpush1.msra.mxu0 %v331
        %459 = vmatprep.subr.mxu0 0.0
        %460 = vmatpush2.msra.mxu0 0.0
        %461 = vmatprep.subr.mxu0 0.0
        %462 = vmatpush2.msra.mxu0 0.0
        %463 = vmatprep.subr.mxu0 0.0
        %464 = vmatpush2.msra.mxu0 0.0
        %465 = vmatprep.subr.mxu0 0.0
        %466 = vmatpush2.msra.mxu0 0.0
        %467 = vmatprep.subr.mxu0 0.0
        %468 = vmatpush2.msra.mxu0 0.0
        %469 = vmatprep.subr.mxu0 0.0
        %470 = vmatpush2.msra.mxu0 0.0
        %471 = vmatprep.subr.mxu0 0.0
        %472 = vmatpush2.msra.mxu0 0.0
        %473 = vmatprep.subr.mxu0 0.0
        %474 = vmatpush2.msra.mxu0 0.0
        %475 = vmatprep.subr.mxu0 0.0
        %476 = vmatpush2.msra.mxu0 0.0
        %477 = vmatprep.subr.mxu0 0.0
        %478 = vmatpush2.msra.mxu0 0.0
        %479 = vmatprep.subr.mxu0 0.0
        %480 = vmatpush2.msra.mxu0 0.0
        %481 = vmatprep.subr.mxu0 0.0
        %482 = vmatpush2.msra.mxu0 0.0
        %483 = vmatprep.subr.mxu0 0.0
        %484 = vmatpush2.msra.mxu0 0.0
        %485 = vmatprep.subr.mxu0 0.0
        %486 = vmatpush2.msra.mxu0 0.0
        %487 = vmatprep.subr.mxu0 0.0
        %488 = vmatpush2.msra.mxu0 0.0
        %489 = vmatprep.subr.mxu0 0.0
        %490 = vmatpush2.msra.mxu0 0.0
        %491 = vmatprep.mubr.f32.mxu0 0.0
        %492 = vmatmul.mubr.f32.gmra.mxu0 %v425
        %v493 = vpop.f32.mrf.mxu0
        %v494 = vadd.f32 0.0, %v493
        %v495 = vpop.f32.mrf.mxu0
        %496 = vdwg.mxu0
        %s497 = smul.u32 %s26, 8
        %s498 = scalar_lea.vmem [#allocation2], %s497
        %499 = vst.msk [vmem:[%s498] sm:$0xff] %vm332, %v494
        %p500 = scmp.eq.s32.totalorder %s26, 3
        // Predicated region
        $region33: #{attention_forward.4} parent=31 // pred_check
          %p501 = pneg %p500
        $region34: #{attention_forward.4} parent=31 // pred_check_branch
          %503 = sbr.rel (%p501) target = $region36
        $region35: #{attention_forward.4} parent=31 // pred_region
          %v504 = vld [vmem:[#allocation2] sm:$0xff]
          %505 = vst.msk [vmem:[%s327] sm:$0xff] %vm332, %v504
          %s506 = scalar_lea.vmem [#allocation2], 8
          %v507 = vld [vmem:[%s506] sm:$0xff]
          %509 = vrot.lane.b32.xlu0 %v507, 8
          %v510 = vpop.permute.xlu0 %509
          %vm512 = vcmask 130112
          %513 = vst.msk [vmem:[%s327] sm:$0xff] %vm512, %v510
          %s514 = scalar_lea.vmem [#allocation2], 16
          %v515 = vld [vmem:[%s514] sm:$0xff]
          %517 = vrot.lane.b32.xlu0 %v515, 16
          %v518 = vpop.permute.xlu0 %517
          %vm520 = vcmask 195712
          %521 = vst.msk [vmem:[%s327] sm:$0xff] %vm520, %v518
          %s522 = scalar_lea.vmem [#allocation2], 24
          %v523 = vld [vmem:[%s522] sm:$0xff]
          %525 = vrot.lane.b32.xlu0 %v523, 24
          %v526 = vpop.permute.xlu0 %525
          %vm528 = vcmask 261312
          %529 = vst.msk [vmem:[%s327] sm:$0xff] %vm528, %v526
        $region36: #{attention_forward.4} parent=31 // pred_fallthru
          _
        %s530 = sand.u32 %s136, 1
        %s531 = scalar_lea.sflag [#allocation4], %s530
        %s532 = sand.u32 %s136, 1
        %s533 = smul.addr %s532, 8
        %s534 = scalar_lea.vmem [#allocation3], %s533
        %p535 = scmp.lt.s32.totalorder %s24, 1
        %s536 = scalar_select %p535, %s24, 1
        %p537 = scmp.lt.s32.totalorder %s25, 0
        %s538 = scalar_select %p537, %s25, 0
        %s539 = sadd.s32 %s538, %s536
        %s540 = smul.addr %s539, 8
        %s541 = scalar_lea.vmem %s4, %s540
        // Predicated region
        $region37: #{attention_forward.4} parent=31 // pred_check
          %p542 = pneg %p146
        $region38: #{attention_forward.4} parent=31 // pred_check_branch
          %544 = sbr.rel (%p542) target = $region40
        $region39: #{attention_forward.4} parent=31 // pred_region
          %s546 = ssub.s32 128, 128
          %547 = vsyncadd %s531, %s546
          %s548 = sadd.s32 %s25, %s26
          %s549 = smul.addr %s24, 4
          %s550 = sadd.s32 %s548, %s549
          %s551 = smul.addr %s550, 128
          %s552 = scalar_lea.hbm %s3, %s551
          %s554 = sshll.u32 %s534, 4
          %s555 = int_to_ptr.vmem [resolvable:$true] %s554
          %557 = dma.vmem_to_hbm [thread:$0]  %s555, 128, %s552, %s531
        $region40: #{attention_forward.4} parent=31 // pred_fallthru
          _
        // Predicated region
        $region41: #{attention_forward.4} parent=31 // pred_check
          %p558 = pneg %p174
        $region42: #{attention_forward.4} parent=31 // pred_check_branch
          %560 = sbr.rel (%p558) target = $region44
        $region43: #{attention_forward.4} parent=31 // pred_region
          _
        $region44: #{attention_forward.4} parent=31 // pred_fallthru
          _
      $region32: #{attention_forward.4} parent=5 // pred_fallthru
        _
      %p561 = scmp.le.s32.totalorder 2, %s14
      // Predicated region
      $region45: #{attention_forward.4} parent=5 // pred_check
        %p562 = pneg %p561
      $region46: #{attention_forward.4} parent=5 // pred_check_branch
        %564 = sbr.rel (%p562) target = $region48
      $region47: #{attention_forward.4} parent=5 // pred_region
        %s565 = ssub.s32 %s14, 2
        // Predicated region
        $region49: #{attention_forward.4} parent=47 // pred_check
          %p566 = pneg %p152
        $region50: #{attention_forward.4} parent=47 // pred_check_branch
          %568 = sbr.rel (%p566) target = $region52
        $region51: #{attention_forward.4} parent=47 // pred_region
          %s569 = sand.u32 %s137, 1
          %s570 = scalar_lea.sflag [#allocation4], %s569
          %s571 = sand.u32 %s137, 1
          %s572 = smul.addr %s571, 8
          %s573 = scalar_lea.vmem [#allocation3], %s572
          %574 = dma.done %s570, 128
        $region52: #{attention_forward.4} parent=47 // pred_fallthru
          _
        // Predicated region
        $region53: #{attention_forward.4} parent=47 // pred_check
          %p575 = pneg %p180
        $region54: #{attention_forward.4} parent=47 // pred_check_branch
          %577 = sbr.rel (%p575) target = $region56
        $region55: #{attention_forward.4} parent=47 // pred_region
          %p578 = scmp.lt.s32.totalorder %s27, 1
          %s579 = scalar_select %p578, %s27, 1
          %p580 = scmp.lt.s32.totalorder %s28, 0
          %s581 = scalar_select %p580, %s28, 0
          %s582 = sadd.s32 %s581, %s579
          %s583 = smul.addr %s582, 8
          %s584 = scalar_lea.vmem %s4, %s583
        $region56: #{attention_forward.4} parent=47 // pred_fallthru
          _
      $region48: #{attention_forward.4} parent=5 // pred_fallthru
        _
    $region6: #{attention_forward.4} parent=1 // loop_footer
      %s18 = sadd.s32 1, %s14
    $region7: #{attention_forward.4} parent=1 // loop_footer_branch
      %13 = sbr.rel target = $region3
    $region8: #{attention_forward.4} parent=1 // loop_exit
      _
    %585 = vsyncpa [#allocation4], 1
    %s586 = scalar_lea.sflag [#allocation4], 1
    %587 = vsyncpa %s586, 1

// kernel: attention_forward.5
$region0: #{attention_forward.5}
  #allocation0 [shape = 'u32[]', space=smem, size = 0x4, offset = 0x4, fixed_abs, tag = 'smem constant byte address 0x4 - core index']
  #allocation1 [shape = 'u32[144,128]{1,0:T(1,128)}', space=vmem, size = 0x12000, scoped, tag = 'internal scratch']
  #allocation2 [shape = 'f32[16,32]{1,0:T(8,128)}', space=vmem, size = 0x2000, scoped, tag = 'scratch operand']
  %s0 = inlined_call_operand.vmem [shape: f32[16,32], index: 0, kind: input, shape index: {}]
  %s1 = inlined_call_operand.vmem [shape: f32[32,32], index: 1, kind: input, shape index: {}]
  %s2 = inlined_call_operand.vmem [shape: f32[1,32], index: 2, kind: input, shape index: {}]
  %s3 = inlined_call_operand.hbm [shape: f32[16,32], index: 3, kind: output, shape index: {}]
  %s4 = sld [smem:[#allocation0]]
  $region30: #{attention_forward.5} parent=0
    _
  %s6 = ssub.s32 1, %s4
  %s7 = scalar_select 0, %s6, %s4
  $region1: #{attention_forward.5} parent=0
    #allocation3 [shape = 'u8[8192]{0}', space=vmem, size = 0x2000, scoped, tag = 'output window, operand 0, single buffered']
    #allocation4 [shape = 's32[1]{0}', space=sflag, size = 0x4, scoped, tag = 'scoped memory for attention_forward.5']
    %8 = vsyncpa [#allocation4], 0
    // Predicated region
    $region2: #{attention_forward.5} parent=1 // pred_check
      _
    $region3: #{attention_forward.5} parent=1 // pred_check_branch
      %10 = sbr.rel (0) target = $region5
    $region4: #{attention_forward.5} parent=1 // pred_region
      _
    $region5: #{attention_forward.5} parent=1 // pred_fallthru
      _
    // Predicated region
    $region6: #{attention_forward.5} parent=1 // pred_check
      _
    $region7: #{attention_forward.5} parent=1 // pred_check_branch
      %12 = sbr.rel (0) target = $region9
    $region8: #{attention_forward.5} parent=1 // pred_region
      _
    $region9: #{attention_forward.5} parent=1 // pred_fallthru
      _
    // Predicated region
    $region10: #{attention_forward.5} parent=1 // pred_check
      _
    $region11: #{attention_forward.5} parent=1 // pred_check_branch
      %14 = sbr.rel (0) target = $region13
    $region12: #{attention_forward.5} parent=1 // pred_region
      _
    $region13: #{attention_forward.5} parent=1 // pred_fallthru
      _
    %p15 = scmp.eq.s32.totalorder 0, 0
    // Predicated region
    $region14: #{attention_forward.5} parent=1 // pred_check
      %p16 = pneg %p15
    $region15: #{attention_forward.5} parent=1 // pred_check_branch
      %18 = sbr.rel (%p16) target = $region17
    $region16: #{attention_forward.5} parent=1 // pred_region
      %vm19 = vcmask 261120
      %20 = vst.msk [vmem:[#allocation2] sm:$0xff] %vm19, 0.0
      %21 = vst.msk [vmem:[#allocation2 + $0x8] sm:$0xff] %vm19, 0.0
    $region17: #{attention_forward.5} parent=1 // pred_fallthru
      _
    %v22 = vld [vmem:[#allocation2] sm:$0xff]
    %v23 = vld [vmem:[#allocation2 + $0x8] sm:$0xff]
    %v24 = vld [vmem:[%s0] sm:$0xff]
    %v25 = vld [vmem:[%s0 + $0x8] sm:$0xff]
    %v26 = vld [vmem:[%s1] sm:$0xff]
    %v27 = vld [vmem:[%s1 + $0x8] sm:$0xff]
    %v28 = vld [vmem:[%s1 + $0x10] sm:$0xff]
    %v29 = vld [vmem:[%s1 + $0x18] sm:$0xff]
    %vm30 = vcmask 261120
    %v32 = vsel %vm30, %v24, 0
    %v35 = vsel %vm30, %v25, 0
    %37 = vmatprep.subr.mxu0 0.0
    %38 = vmatpush1.msra.mxu0 0.0
    %39 = vmatprep.subr.mxu0 0.0
    %40 = vmatpush1.msra.mxu0 0.0
    %41 = vmatprep.subr.mxu0 0.0
    %42 = vmatpush1.msra.mxu0 0.0
    %43 = vmatprep.subr.mxu0 0.0
    %44 = vmatpush1.msra.mxu0 0.0
    %45 = vmatprep.subr.mxu0 0.0
    %46 = vmatpush1.msra.mxu0 0.0
    %47 = vmatprep.subr.mxu0 0.0
    %48 = vmatpush1.msra.mxu0 0.0
    %49 = vmatprep.subr.mxu0 0.0
    %50 = vmatpush1.msra.mxu0 0.0
    %51 = vmatprep.subr.mxu0 0.0
    %52 = vmatpush1.msra.mxu0 0.0
    %53 = vmatprep.subr.mxu0 0.0
    %54 = vmatpush1.msra.mxu0 0.0
    %55 = vmatprep.subr.mxu0 0.0
    %56 = vmatpush1.msra.mxu0 0.0
    %57 = vmatprep.subr.mxu0 0.0
    %58 = vmatpush1.msra.mxu0 0.0
    %59 = vmatprep.subr.mxu0 0.0
    %60 = vmatpush1.msra.mxu0 0.0
    %61 = vmatprep.subr.mxu0 0.0
    %62 = vmatpush1.msra.mxu0 %v29
    %63 = vmatprep.subr.mxu0 0.0
    %64 = vmatpush1.msra.mxu0 %v28
    %65 = vmatprep.subr.mxu0 0.0
    %66 = vmatpush1.msra.mxu0 %v27
    %67 = vmatprep.subr.mxu0 0.0
    %68 = vmatpush1.msra.mxu0 %v26
    %69 = vmatprep.subr.mxu0 0.0
    %70 = vmatpush2.msra.mxu0 0.0
    %71 = vmatprep.subr.mxu0 0.0
    %72 = vmatpush2.msra.mxu0 0.0
    %73 = vmatprep.subr.mxu0 0.0
    %74 = vmatpush2.msra.mxu0 0.0
    %75 = vmatprep.subr.mxu0 0.0
    %76 = vmatpush2.msra.mxu0 0.0
    %77 = vmatprep.subr.mxu0 0.0
    %78 = vmatpush2.msra.mxu0 0.0
    %79 = vmatprep.subr.mxu0 0.0
    %80 = vmatpush2.msra.mxu0 0.0
    %81 = vmatprep.subr.mxu0 0.0
    %82 = vmatpush2.msra.mxu0 0.0
    %83 = vmatprep.subr.mxu0 0.0
    %84 = vmatpush2.msra.mxu0 0.0
    %85 = vmatprep.subr.mxu0 0.0
    %86 = vmatpush2.msra.mxu0 0.0
    %87 = vmatprep.subr.mxu0 0.0
    %88 = vmatpush2.msra.mxu0 0.0
    %89 = vmatprep.subr.mxu0 0.0
    %90 = vmatpush2.msra.mxu0 0.0
    %91 = vmatprep.subr.mxu0 0.0
    %92 = vmatpush2.msra.mxu0 0.0
    %93 = vmatprep.subr.mxu0 0.0
    %94 = vmatpush2.msra.mxu0 0.0
    %95 = vmatprep.subr.mxu0 0.0
    %96 = vmatpush2.msra.mxu0 0.0
    %97 = vmatprep.subr.mxu0 0.0
    %98 = vmatpush2.msra.mxu0 0.0
    %99 = vmatprep.subr.mxu0 0.0
    %100 = vmatpush2.msra.mxu0 0.0
    %101 = vmatprep.mubr.f32.mxu0 0.0
    %102 = vmatmul.mubr.f32.gmra.mxu0 %v32
    %v103 = vpop.f32.mrf.mxu0
    %v104 = vadd.f32 0.0, %v103
    %v105 = vpop.f32.mrf.mxu0
    %106 = vmatprep.mubr.f32.mxu0 0.0
    %107 = vmatmul.mubr.f32.gmra.mxu0 %v35
    %v108 = vpop.f32.mrf.mxu0
    %v109 = vadd.f32 0.0, %v108
    %v110 = vpop.f32.mrf.mxu0
    %111 = vdwg.mxu0
    %v112 = vadd.f32 %v22, %v104
    %v113 = vadd.f32 %v23, %v109
    %114 = vst.msk [vmem:[#allocation2] sm:$0xff] %vm30, %v112
    %115 = vst.msk [vmem:[#allocation2 + $0x8] sm:$0xff] %vm30, %v113
    // Predicated region
    $region18: #{attention_forward.5} parent=1 // pred_check
      %p116 = pneg %p15
    $region19: #{attention_forward.5} parent=1 // pred_check_branch
      %118 = sbr.rel (%p116) target = $region21
    $region20: #{attention_forward.5} parent=1 // pred_region
      %v119 = vld [vmem:[#allocation2] sm:$0xff]
      %v120 = vld [vmem:[#allocation2 + $0x8] sm:$0xff]
      %v121 = vld [vmem:[%s2] sm:$0x1]
      %v123 = vlaneseq
      %v124 = vshrl.u32 %v123, 7
      %v125 = vsub.s32 0, %v124
      %v126 = vrot.slane %v121, %v125
      %v128 = vadd.f32 %v119, %v126
      %v129 = vadd.f32 %v120, %v126
      %130 = vst.msk [vmem:[#allocation3] sm:$0xff] %vm30, %v128
      %131 = vst.msk [vmem:[#allocation3 + $0x8] sm:$0xff] %vm30, %v129
    $region21: #{attention_forward.5} parent=1 // pred_fallthru
      _
    // Predicated region
    $region22: #{attention_forward.5} parent=1 // pred_check
      _
    $region23: #{attention_forward.5} parent=1 // pred_check_branch
      %133 = sbr.rel (0) target = $region25
    $region24: #{attention_forward.5} parent=1 // pred_region
      %s135 = ssub.s32 256, 256
      %136 = vsyncadd [#allocation4], %s135
      %s137 = sshll.u32 [#allocation3], 4
      %s138 = int_to_ptr.vmem [resolvable:$true] %s137
      %143 = dma.vmem_to_hbm [thread:$0]  %s138, 256, %s3, [#allocation4], 128, 128, 8
    $region25: #{attention_forward.5} parent=1 // pred_fallthru
      _
    // Predicated region
    $region26: #{attention_forward.5} parent=1 // pred_check
      _
    $region27: #{attention_forward.5} parent=1 // pred_check_branch
      %145 = sbr.rel (0) target = $region29
    $region28: #{attention_forward.5} parent=1 // pred_region
      %146 = dma.done [#allocation4], 256
    $region29: #{attention_forward.5} parent=1 // pred_fallthru
      _
    %147 = vsyncpa [#allocation4], 1

</llo_original>
